<compile_context>
chip_gen: v7x
topology: tpu7x:2x2x1
jax: 0.10.0
libtpu: 0.0.40
codegen_flags: <defaults>
</compile_context>

<pallas_src>
import functools

import jax
import jax.numpy as jnp
from jax.experimental import pallas as pl
from jax.experimental.pallas import tpu as pltpu


# --------------------------------------------------------------------------- kernel
def _concat_linear_kernel(xy_ref, w_ref, b_ref, out_ref, acc_ref):
    """One (out-tile j, reduction-tile k) grid step of: out = xy @ W_t + b.

    xy_ref:  (1, tk)   slice of the concatenated input row (reduction axis)
    w_ref:   (tk, tn)  pre-transposed weight tile, (in_features, out_features) layout
    b_ref:   (1, tn)   bias tile
    out_ref: (1, tn)   output tile (written only on the last reduction step)
    acc_ref: (1, tn)   f32 VMEM accumulator, resident across the reduction axis
    """
    k = pl.program_id(1)

    @pl.when(k == 0)
    def _init():
        acc_ref[...] = jnp.zeros_like(acc_ref)

    # Natural MXU contraction (LHS lanes x RHS sublanes): no per-tile weight transpose.
    acc_ref[...] += jnp.dot(
        xy_ref[...], w_ref[...], preferred_element_type=jnp.float32
    )

    @pl.when(k == pl.num_programs(1) - 1)
    def _finalize():
        out_ref[...] = (
            acc_ref[...] + b_ref[...].astype(jnp.float32)
        ).astype(out_ref.dtype)


# ----------------------------------------------------------------- tile-size policy
_FALLBACK_VMEM = 64 * 1024 * 1024  # conservative: v7x per-TensorCore physical VMEM


@functools.lru_cache(maxsize=1)
def _vmem_capacity_bytes() -> int:
    try:
        return int(pltpu.get_tpu_info().vmem_capacity_bytes)
    except Exception:  # query unavailable (e.g. interpret mode) -> conservative default
        return _FALLBACK_VMEM


def _pick_tiles(C: int, w_itemsize: int):
    """Generation-aware (tk, tn, vmem_limit_bytes) for streaming the (C, C) weight.

    The kernel is a bandwidth-bound M=1 GEMV: the double-buffered weight tile is the
    only large VMEM allocation, so it gets ~2/3 of an explicit scoped-VMEM budget
    (3/4 of physical VMEM: ~48 MiB on v7x, ~96 MiB on v5e/v6e).  Bigger tiles => fewer
    ~0.35 us grid steps and much closer to the HBM roofline than 128-wide tiles.
    """
    phys = _vmem_capacity_bytes()
    vmem_limit = (phys // 4) * 3          # explicit scoped-VMEM budget (leave headroom)
    w_buf = vmem_limit // 3               # budget for ONE weight buffer (x2 pipelined)

    # Whole weight fits in one block -> single-step grid, no tiling at all.
    if C * C * w_itemsize <= w_buf:
        return C, C, vmem_limit

    if C % 128 != 0:
        # N-only tiling: a partial reduction (K) tile would feed out-of-bounds garbage
        # into the accumulator, so keep tk == C (full extent is always layout-legal).
        tn = max(128, min(C - C % 128, (w_buf // (C * w_itemsize)) // 128 * 128))
        vmem_limit = min(
            max(vmem_limit, 2 * C * tn * w_itemsize + (8 << 20)), phys
        )
        # TODO(synk): for very large C that is not a multiple of 128, zero-pad C to a
        # multiple of 128 upstream so the reduction axis can be tiled too.
        return C, tn, vmem_limit

    # C is a multiple of 128: tile both axes with divisors of C (no partial tiles).
    m = C // 128

    def _largest_divisor(cap_units: int) -> int:
        best = 1
        for d in range(1, m + 1):
            if m % d == 0 and d <= cap_units:
                best = d
        return best

    # Lane tile over out_features: large enough for >= 2 KiB DMA row chunks and
    # unmasked lane-dense stores, but leave budget for a deep reduction tile.
    tn_cap_units = max(1, min(16, w_buf // (128 * 128 * w_itemsize)))  # <= 2048 lanes
    tn = 128 * _largest_divisor(tn_cap_units)
    # Reduction tile over in_features: the rest of the weight-buffer budget.
    tk_cap_units = max(1, w_buf // (tn * 128 * w_itemsize))
    tk = 128 * _largest_divisor(tk_cap_units)
    return tk, tn, vmem_limit


# --------------------------------------------------------------------------- wrapper
def prepare_concat_linear_params(weight, dtype=None):
    """One-time (module-init) conversion of the PyTorch Linear weight.

    Transposes (out_features, in_features) -> (in_features, out_features) so the kernel
    can use a plain row-major contraction with no in-kernel transpose.  Optionally cast
    (e.g. to bfloat16) to halve the streamed HBM bytes of this bandwidth-bound GEMV.
    """
    w_t = jnp.transpose(jnp.asarray(weight))
    if dtype is not None:
        w_t = w_t.astype(dtype)
    return w_t


@functools.partial(jax.jit, static_argnums=(4,))
def concat_linear_forward(x, y, w_t, bias, x_n_features):
    """Reproduces ConcatLinear.forward.

    x:    (1, x_n_features) f32
    y:    (1, y_n_features) f32
    w_t:  (C, C) pre-transposed weight from prepare_concat_linear_params (in, out layout)
    bias: (C,)
    Returns (_x, _y): 1-D arrays of shape (x_n_features,) and (y_n_features,).
    """
    xf = int(x_n_features)
    yf = y.shape[-1]
    C = xf + yf
    assert w_t.shape == (C, C) and bias.shape[-1] == C

    # Concat hoisted out of the grid loop: O(C) bytes, done once by XLA around the call.
    xy = jnp.concatenate([x, y], axis=-1)           # (1, C)
    bias2d = bias.reshape(1, C)

    w_itemsize = jnp.dtype(w_t.dtype).itemsize
    tk, tn, vmem_limit = _pick_tiles(C, w_itemsize)
    grid = (pl.cdiv(C, tn), pl.cdiv(C, tk))         # (out tiles [parallel], K tiles [last])

    out = pl.pallas_call(
        _concat_linear_kernel,
        out_shape=jax.ShapeDtypeStruct((1, C), x.dtype),
        grid_spec=pltpu.PrefetchScalarGridSpec(
            num_scalar_prefetch=0,
            grid=grid,
            in_specs=[
                pl.BlockSpec((1, tk), lambda j, k: (0, k)),   # xy reduction slice
                pl.BlockSpec((tk, tn), lambda j, k: (k, j)),  # pre-transposed weight tile
                pl.BlockSpec((1, tn), lambda j, k: (0, j)),   # bias tile
            ],
            out_specs=pl.BlockSpec((1, tn), lambda j, k: (0, j)),
            scratch_shapes=[pltpu.VMEM((1, tn), jnp.float32)],
        ),
        compiler_params=pltpu.CompilerParams(
            dimension_semantics=("parallel", "arbitrary"),    # N tiles across TCs; K is a reduction
            vmem_limit_bytes=int(vmem_limit),
        ),
        cost_estimate=pl.CostEstimate(
            flops=2 * C * C,
            transcendentals=0,
            bytes_accessed=int(C * C * w_itemsize + 3 * C * 4),
        ),
    )(xy, w_t, bias2d)

    # squeeze(0) + split at x_n_features: O(C) bytes, fused by jit around the kernel.
    row = out[0]
    return row[:xf], row[xf:]


# ------------------------------------------------------------------------------ demo
if __name__ == "__main__":
    # Small, module-consistent sizes: C = 48 + 80 = 128.
    x_n_features = 48
    y_n_features = 80
    C = x_n_features + y_n_features

    key = jax.random.PRNGKey(0)
    kx, ky, kw, kb = jax.random.split(key, 4)

    x = jax.random.normal(kx, (1, x_n_features), dtype=jnp.float32)
    y = jax.random.normal(ky, (1, y_n_features), dtype=jnp.float32)

    # nn.Linear default init: U(-1/sqrt(in_features), 1/sqrt(in_features)).
    bound = 1.0 / jnp.sqrt(jnp.float32(C))
    weight = jax.random.uniform(kw, (C, C), jnp.float32, -bound, bound)  # PyTorch (out, in)
    bias = jax.random.uniform(kb, (C,), jnp.float32, -bound, bound)

    # One-time parameter prep (module init), not a per-forward HBM pass.
    w_t = prepare_concat_linear_params(weight)

    _x, _y = concat_linear_forward(x, y, w_t, bias, x_n_features)
    jax.block_until_ready((_x, _y))

    # Plain-JAX reference check against the original (out, in) weight.
    ref = (jnp.concatenate([x, y], axis=-1) @ weight.T + bias)[0]
    assert _x.shape == (x_n_features,) and _y.shape == (y_n_features,)
    assert jnp.allclose(_x, ref[:x_n_features], atol=1e-5, rtol=1e-5)
    assert jnp.allclose(_y, ref[x_n_features:], atol=1e-5, rtol=1e-5)

    print("KERNEL_OK")
</pallas_src>

<mosaic_0001>
module attributes {stable_mosaic.version = 11 : i64} {
  func.func @_concat_linear_kernel(%arg0: i32, %arg1: i32, %arg2: memref<1x128xf32, #tpu.memory_space<vmem>>, %arg3: memref<128x128xf32, #tpu.memory_space<vmem>>, %arg4: memref<1x128xf32, #tpu.memory_space<vmem>>, %arg5: memref<1x128xf32, #tpu.memory_space<vmem>>, %arg6: memref<1x128xf32, #tpu.memory_space<vmem>>) attributes {dimension_semantics = [#tpu.dimension_semantics<parallel>, #tpu.dimension_semantics<arbitrary>], iteration_bounds = array<i64: 1, 1>, scalar_prefetch = 0 : i64, scratch_operands = 1 : i64, tpu.core_type = #tpu.core_type<tc>, window_params = [{transform_indices = @transform_0, window_bounds = array<i64: 1, 128>}, {transform_indices = @transform_1, window_bounds = array<i64: 128, 128>}, {transform_indices = @transform_2, window_bounds = array<i64: 1, 128>}, {transform_indices = @transform_3, window_bounds = array<i64: 1, 128>}]} {
    %c0_i32 = arith.constant 0 : i32
    %0 = arith.cmpi eq, %arg1, %c0_i32 : i32
    %1 = arith.extui %0 : i1 to i32
    %c0_i32_0 = arith.constant 0 : i32
    %2 = arith.cmpi ne, %1, %c0_i32_0 : i32
    scf.if %2 {
      %cst_10 = arith.constant 0.000000e+00 : f32
      %12 = vector.broadcast %cst_10 : f32 to vector<1x128xf32>
      %c0_11 = arith.constant 0 : index
      %c0_12 = arith.constant 0 : index
      %13 = vector.load %arg6[%c0_11, %c0_12] : memref<1x128xf32, #tpu.memory_space<vmem>>, vector<1x128xf32>
      tpu.vector_store %arg6[%c0_11, %c0_12], %12 {strides = array<i32>} : memref<1x128xf32, #tpu.memory_space<vmem>>, vector<1x128xf32>,
    } else {
    }
    %c0 = arith.constant 0 : index
    %c0_1 = arith.constant 0 : index
    %3 = vector.load %arg6[%c0, %c0_1] : memref<1x128xf32, #tpu.memory_space<vmem>>, vector<1x128xf32>
    %c0_2 = arith.constant 0 : index
    %c0_3 = arith.constant 0 : index
    %4 = vector.load %arg2[%c0_2, %c0_3] : memref<1x128xf32, #tpu.memory_space<vmem>>, vector<1x128xf32>
    %c0_4 = arith.constant 0 : index
    %c0_5 = arith.constant 0 : index
    %5 = vector.load %arg3[%c0_4, %c0_5] : memref<128x128xf32, #tpu.memory_space<vmem>>, vector<128x128xf32>
    %cst = arith.constant dense<0.000000e+00> : vector<1x128xf32>
    %6 = tpu.matmul %4, %5, %cst {dimension_numbers = #tpu.dot_dimension_numbers<[1], [0], [0], [1], [0, 0, 1, 1], [], []>} : vector<1x128xf32>, vector<128x128xf32>, vector<1x128xf32> -> vector<1x128xf32>
    %7 = arith.addf %3, %6 : vector<1x128xf32>
    %c0_6 = arith.constant 0 : index
    %c0_7 = arith.constant 0 : index
    %8 = vector.load %arg6[%c0_6, %c0_7] : memref<1x128xf32, #tpu.memory_space<vmem>>, vector<1x128xf32>
    tpu.vector_store %arg6[%c0_6, %c0_7], %7 {strides = array<i32>} : memref<1x128xf32, #tpu.memory_space<vmem>>, vector<1x128xf32>,
    %c0_i32_8 = arith.constant 0 : i32
    %9 = arith.cmpi eq, %arg1, %c0_i32_8 : i32
    %10 = arith.extui %9 : i1 to i32
    %c0_i32_9 = arith.constant 0 : i32
    %11 = arith.cmpi ne, %10, %c0_i32_9 : i32
    scf.if %11 {
      %c0_10 = arith.constant 0 : index
      %c0_11 = arith.constant 0 : index
      %12 = vector.load %arg6[%c0_10, %c0_11] : memref<1x128xf32, #tpu.memory_space<vmem>>, vector<1x128xf32>
      %c0_12 = arith.constant 0 : index
      %c0_13 = arith.constant 0 : index
      %13 = vector.load %arg4[%c0_12, %c0_13] : memref<1x128xf32, #tpu.memory_space<vmem>>, vector<1x128xf32>
      %14 = arith.addf %12, %13 : vector<1x128xf32>
      %c0_14 = arith.constant 0 : index
      %c0_15 = arith.constant 0 : index
      %15 = vector.load %arg5[%c0_14, %c0_15] : memref<1x128xf32, #tpu.memory_space<vmem>>, vector<1x128xf32>
      tpu.vector_store %arg5[%c0_14, %c0_15], %14 {strides = array<i32>} : memref<1x128xf32, #tpu.memory_space<vmem>>, vector<1x128xf32>,
    } else {
    }
    return
  }
  func.func @transform_0(%arg0: i32, %arg1: i32) -> (i32, i32) {
    %c0_i32 = arith.constant 0 : i32
    %c0_i32_0 = arith.constant 0 : i32
    return %c0_i32, %arg1 : i32, i32
  }
  func.func @transform_1(%arg0: i32, %arg1: i32) -> (i32, i32) {
    %c0_i32 = arith.constant 0 : i32
    return %arg1, %arg0 : i32, i32
  }
  func.func @transform_2(%arg0: i32, %arg1: i32) -> (i32, i32) {
    %c0_i32 = arith.constant 0 : i32
    %c0_i32_0 = arith.constant 0 : i32
    return %c0_i32, %arg0 : i32, i32
  }
  func.func @transform_3(%arg0: i32, %arg1: i32) -> (i32, i32) {
    %c0_i32 = arith.constant 0 : i32
    %c0_i32_0 = arith.constant 0 : i32
    return %c0_i32, %arg0 : i32, i32
  }
}

</mosaic_0001>

<llo_original>
// kernel: concat_linear_forward.1
$region0: #{concat_linear_forward.1}
  #allocation0 [shape = 'u32[]', space=smem, size = 0x4, offset = 0x4, fixed_abs, tag = 'smem constant byte address 0x4 - core index']
  #allocation1 [shape = 'u32[144,128]{1,0:T(1,128)}', space=vmem, size = 0x12000, scoped, tag = 'internal scratch']
  #allocation2 [shape = 'f32[1,128]{1,0:T(1,128)}', space=vmem, size = 0x200, scoped, tag = 'scratch operand']
  %s0 = inlined_call_operand.vmem [shape: f32[1,128], index: 0, kind: input, shape index: {}]
  %s1 = inlined_call_operand.hbm [shape: f32[128,128], index: 1, kind: input, shape index: {}]
  %s2 = inlined_call_operand.vmem [shape: f32[1,128], index: 2, kind: input, shape index: {}]
  %s3 = inlined_call_operand.vmem [shape: f32[1,128], index: 3, kind: output, shape index: {}]
  %s4 = sld [smem:[#allocation0]]
  $region34: #{concat_linear_forward.1} parent=0
    _
  %s6 = ssub.s32 1, %s4
  %s7 = scalar_select 0, %s6, %s4
  $region1: #{concat_linear_forward.1} parent=0
    #allocation3 [shape = 'u8[65536]{0}', space=vmem, size = 0x10000, scoped, tag = 'input window, operand 1, single buffered']
    #allocation4 [shape = 's32[1]{0}', space=sflag, size = 0x4, scoped, tag = 'scoped memory for concat_linear_forward.1']
    %8 = vsyncpa [#allocation4], 0
    // Predicated region
    $region2: #{concat_linear_forward.1} parent=1 // pred_check
      _
    $region3: #{concat_linear_forward.1} parent=1 // pred_check_branch
      %10 = sbr.rel (0) target = $region5
    $region4: #{concat_linear_forward.1} parent=1 // pred_region
      _
    $region5: #{concat_linear_forward.1} parent=1 // pred_fallthru
      _
    // Predicated region
    $region6: #{concat_linear_forward.1} parent=1 // pred_check
      _
    $region7: #{concat_linear_forward.1} parent=1 // pred_check_branch
      %12 = sbr.rel (0) target = $region9
    $region8: #{concat_linear_forward.1} parent=1 // pred_region
      %s14 = ssub.s32 2048, 2048
      %15 = vsyncadd [#allocation4], %s14
      %s16 = sshll.u32 [#allocation3], 4
      %s17 = int_to_ptr.vmem [resolvable:$true] %s16
      %22 = dma.hbm_to_vmem [thread:$0]  %s1, 2048, %s17, [#allocation4], 128, 128, 8
    $region9: #{concat_linear_forward.1} parent=1 // pred_fallthru
      _
    // Predicated region
    $region10: #{concat_linear_forward.1} parent=1 // pred_check
      _
    $region11: #{concat_linear_forward.1} parent=1 // pred_check_branch
      %24 = sbr.rel (0) target = $region13
    $region12: #{concat_linear_forward.1} parent=1 // pred_region
      _
    $region13: #{concat_linear_forward.1} parent=1 // pred_fallthru
      _
    // Predicated region
    $region14: #{concat_linear_forward.1} parent=1 // pred_check
      _
    $region15: #{concat_linear_forward.1} parent=1 // pred_check_branch
      %26 = sbr.rel (0) target = $region17
    $region16: #{concat_linear_forward.1} parent=1 // pred_region
      %27 = dma.done [#allocation4], 2048
    $region17: #{concat_linear_forward.1} parent=1 // pred_fallthru
      _
    %p28 = scmp.eq.s32.totalorder 0, 0
    // Predicated region
    $region18: #{concat_linear_forward.1} parent=1 // pred_check
      %p29 = pneg %p28
    $region19: #{concat_linear_forward.1} parent=1 // pred_check_branch
      %31 = sbr.rel (%p29) target = $region21
    $region20: #{concat_linear_forward.1} parent=1 // pred_region
      %32 = vst [vmem:[#allocation2] sm:$0x1] 0.0
    $region21: #{concat_linear_forward.1} parent=1 // pred_fallthru
      _
    %v33 = vld [vmem:[#allocation2] sm:$0x1]
    %v34 = vld [vmem:[%s0] sm:$0x1]
    %v35 = vld [vmem:[#allocation3] sm:$0xff]
    %v36 = vld [vmem:[#allocation3 + $0x8] sm:$0xff]
    %v37 = vld [vmem:[#allocation3 + $0x10] sm:$0xff]
    %v38 = vld [vmem:[#allocation3 + $0x18] sm:$0xff]
    %v39 = vld [vmem:[#allocation3 + $0x20] sm:$0xff]
    %v40 = vld [vmem:[#allocation3 + $0x28] sm:$0xff]
    %v41 = vld [vmem:[#allocation3 + $0x30] sm:$0xff]
    %v42 = vld [vmem:[#allocation3 + $0x38] sm:$0xff]
    %v43 = vld [vmem:[#allocation3 + $0x40] sm:$0xff]
    %v44 = vld [vmem:[#allocation3 + $0x48] sm:$0xff]
    %v45 = vld [vmem:[#allocation3 + $0x50] sm:$0xff]
    %v46 = vld [vmem:[#allocation3 + $0x58] sm:$0xff]
    %v47 = vld [vmem:[#allocation3 + $0x60] sm:$0xff]
    %v48 = vld [vmem:[#allocation3 + $0x68] sm:$0xff]
    %v49 = vld [vmem:[#allocation3 + $0x70] sm:$0xff]
    %v50 = vld [vmem:[#allocation3 + $0x78] sm:$0xff]
    %51 = vmatprep.subr.mxu0 0.0
    %52 = vmatpush1.msra.mxu0 %v35
    %53 = vmatprep.subr.mxu0 0.0
    %54 = vmatpush1.msra.mxu0 %v36
    %55 = vmatprep.subr.mxu0 0.0
    %56 = vmatpush1.msra.mxu0 %v37
    %57 = vmatprep.subr.mxu0 0.0
    %58 = vmatpush1.msra.mxu0 %v38
    %59 = vmatprep.subr.mxu0 0.0
    %60 = vmatpush1.msra.mxu0 %v39
    %61 = vmatprep.subr.mxu0 0.0
    %62 = vmatpush1.msra.mxu0 %v40
    %63 = vmatprep.subr.mxu0 0.0
    %64 = vmatpush1.msra.mxu0 %v41
    %65 = vmatprep.subr.mxu0 0.0
    %66 = vmatpush1.msra.mxu0 %v42
    %67 = vmatprep.subr.mxu0 0.0
    %68 = vmatpush1.msra.mxu0 %v43
    %69 = vmatprep.subr.mxu0 0.0
    %70 = vmatpush1.msra.mxu0 %v44
    %71 = vmatprep.subr.mxu0 0.0
    %72 = vmatpush1.msra.mxu0 %v45
    %73 = vmatprep.subr.mxu0 0.0
    %74 = vmatpush1.msra.mxu0 %v46
    %75 = vmatprep.subr.mxu0 0.0
    %76 = vmatpush1.msra.mxu0 %v47
    %77 = vmatprep.subr.mxu0 0.0
    %78 = vmatpush1.msra.mxu0 %v48
    %79 = vmatprep.subr.mxu0 0.0
    %80 = vmatpush1.msra.mxu0 %v49
    %81 = vmatprep.subr.mxu0 0.0
    %82 = vmatpush1.msra.mxu0 %v50
    %83 = vmatprep.subr.mxu0 0.0
    %84 = vmatpush1.msra.mxu0 0.0
    %85 = vmatprep.subr.mxu0 0.0
    %86 = vmatpush1.msra.mxu0 0.0
    %87 = vmatprep.subr.mxu0 0.0
    %88 = vmatpush1.msra.mxu0 0.0
    %89 = vmatprep.subr.mxu0 0.0
    %90 = vmatpush1.msra.mxu0 0.0
    %91 = vmatprep.subr.mxu0 0.0
    %92 = vmatpush1.msra.mxu0 0.0
    %93 = vmatprep.subr.mxu0 0.0
    %94 = vmatpush1.msra.mxu0 0.0
    %95 = vmatprep.subr.mxu0 0.0
    %96 = vmatpush1.msra.mxu0 0.0
    %97 = vmatprep.subr.mxu0 0.0
    %98 = vmatpush1.msra.mxu0 0.0
    %99 = vmatprep.subr.mxu0 0.0
    %100 = vmatpush1.msra.mxu0 0.0
    %101 = vmatprep.subr.mxu0 0.0
    %102 = vmatpush1.msra.mxu0 0.0
    %103 = vmatprep.subr.mxu0 0.0
    %104 = vmatpush1.msra.mxu0 0.0
    %105 = vmatprep.subr.mxu0 0.0
    %106 = vmatpush1.msra.mxu0 0.0
    %107 = vmatprep.subr.mxu0 0.0
    %108 = vmatpush1.msra.mxu0 0.0
    %109 = vmatprep.subr.mxu0 0.0
    %110 = vmatpush1.msra.mxu0 0.0
    %111 = vmatprep.subr.mxu0 0.0
    %112 = vmatpush1.msra.mxu0 0.0
    %113 = vmatprep.subr.mxu0 0.0
    %114 = vmatpush1.msra.mxu0 0.0
    %115 = vmatprep.mubr.f32.mxu0 0.0
    %116 = vmatmul.mubr.f32.gmra.mrb[0].mxu0 %v34
    %v117 = vpop.f32.mrb[0].mxu0
    %v118 = vadd.f32 0.0, %v117
    %v119 = vpop.f32.mrb[0].mxu0
    %120 = vdwg.mxu0
    %v121 = vadd.f32 %v33, %v118
    %122 = vst [vmem:[#allocation2] sm:$0x1] %v121
    // Predicated region
    $region22: #{concat_linear_forward.1} parent=1 // pred_check
      %p123 = pneg %p28
    $region23: #{concat_linear_forward.1} parent=1 // pred_check_branch
      %125 = sbr.rel (%p123) target = $region25
    $region24: #{concat_linear_forward.1} parent=1 // pred_region
      %v126 = vld [vmem:[#allocation2] sm:$0x1]
      %v127 = vld [vmem:[%s2] sm:$0x1]
      %v128 = vadd.f32 %v126, %v127
      %129 = vst [vmem:[%s3] sm:$0x1] %v128
    $region25: #{concat_linear_forward.1} parent=1 // pred_fallthru
      _
    // Predicated region
    $region26: #{concat_linear_forward.1} parent=1 // pred_check
      _
    $region27: #{concat_linear_forward.1} parent=1 // pred_check_branch
      %131 = sbr.rel (0) target = $region29
    $region28: #{concat_linear_forward.1} parent=1 // pred_region
      _
    $region29: #{concat_linear_forward.1} parent=1 // pred_fallthru
      _
    // Predicated region
    $region30: #{concat_linear_forward.1} parent=1 // pred_check
      _
    $region31: #{concat_linear_forward.1} parent=1 // pred_check_branch
      %133 = sbr.rel (0) target = $region33
    $region32: #{concat_linear_forward.1} parent=1 // pred_region
      _
    $region33: #{concat_linear_forward.1} parent=1 // pred_fallthru
      _
    %134 = vsyncpa [#allocation4], 1

</llo_original>
